<compile_context>
chip_gen: v7x
topology: tpu7x:2x2x1
jax: 0.10.0
libtpu: 0.0.40
codegen_flags: <defaults>
</compile_context>

<pallas_src>
import functools

import jax
import jax.numpy as jnp
import numpy as np
from jax import lax
from jax.experimental import pallas as pl
from jax.experimental.pallas import tpu as pltpu


# -----------------------------------------------------------------------------
# Pallas kernel: fused  out = maybe_relu(P @ W + bias)
# (BN scale already folded into W, so the epilogue is only bias-add + ReLU.)
# -----------------------------------------------------------------------------
def _matmul_bias_act_kernel(p_ref, w_ref, b_ref, o_ref, *, apply_relu):
    y = jnp.dot(p_ref[...], w_ref[...], preferred_element_type=jnp.float32)
    y = y + b_ref[...]
    if apply_relu:
        y = jnp.maximum(y, 0.0)
    o_ref[...] = y.astype(o_ref.dtype)


def _round_up(x, m):
    return ((x + m - 1) // m) * m


def matmul_bias_act(p, w, bias, relu, tm=256):
    """p: (M, K) patches, w: (K, N) weights, bias: (N,). Returns relu?(p @ w + b)."""
    M, K = p.shape
    K2, N = w.shape
    assert K == K2, (K, K2)
    # Whole weight (K, N) and whole bias live in VMEM; grid only tiles M.
    tm = min(tm, _round_up(M, 8))            # single full-M block for small layers
    grid_m = pl.cdiv(M, tm)                  # ragged edge handled by Pallas
    kernel = functools.partial(_matmul_bias_act_kernel, apply_relu=relu)
    return pl.pallas_call(
        kernel,
        out_shape=jax.ShapeDtypeStruct((M, N), jnp.float32),
        grid_spec=pltpu.PrefetchScalarGridSpec(
            num_scalar_prefetch=0,
            grid=(grid_m,),
            in_specs=[
                pl.BlockSpec((tm, K), lambda i: (i, 0)),   # patch tile
                pl.BlockSpec((K, N), lambda i: (0, 0)),    # full weight (loaded once)
                pl.BlockSpec((1, N), lambda i: (0, 0)),    # folded-BN bias
            ],
            out_specs=pl.BlockSpec((tm, N), lambda i: (i, 0)),
        ),
        compiler_params=pltpu.CompilerParams(
            dimension_semantics=("parallel",),
            vmem_limit_bytes=48 * 1024 * 1024,   # headroom for v7x's 64 MiB VMEM
        ),
    )(p, w, bias.reshape(1, N).astype(jnp.float32))


# -----------------------------------------------------------------------------
# Convolution = im2col (plain-JAX glue) + fused Pallas matmul
# -----------------------------------------------------------------------------
def _im2col(x, kh, kw, stride, ph, pw):
    # TODO(synk): im2col for kh/kw>1 is still materialized in HBM; moving the
    # overlapping-window gather into the kernel index_map would cut HBM traffic.
    if ph or pw:
        x = jnp.pad(x, ((0, 0), (ph, ph), (pw, pw), (0, 0)))
    n, hp, wp, c = x.shape
    oh = (hp - kh) // stride + 1
    ow = (wp - kw) // stride + 1
    cols = []
    for i in range(kh):
        for j in range(kw):
            cols.append(x[:, i:i + oh * stride:stride, j:j + ow * stride:stride, :])
    patches = jnp.stack(cols, axis=-2)          # (n, oh, ow, kh*kw, c)
    return patches.reshape(n * oh * ow, kh * kw * c), (n, oh, ow)


def apply_conv(x, p):
    """x: NHWC. p: dict with wmat (K, Cout), bias, kernel geometry, relu flag."""
    kh, kw, stride, ph, pw = p["kh"], p["kw"], p["stride"], p["ph"], p["pw"]
    n, h, w_, c = x.shape
    if kh == 1 and kw == 1 and stride == 1 and ph == 0 and pw == 0:
        patches, oh, ow = x.reshape(n * h * w_, c), h, w_       # 1x1: pure reshape
    else:
        patches, (n, oh, ow) = _im2col(x, kh, kw, stride, ph, pw)
    out = matmul_bias_act(patches, p["wmat"], p["bias"], p["relu"])
    return out.reshape(n, oh, ow, p["cout"])


def fuse_1x1(plist):
    """Pre-concatenate several 1x1 convs (same input) into one lane-dense matmul."""
    return dict(
        wmat=jnp.concatenate([p["wmat"] for p in plist], axis=1),
        bias=jnp.concatenate([p["bias"] for p in plist], axis=0),
        couts=[p["cout"] for p in plist],
    )


def apply_fused_1x1(x, fp):
    n, h, w_, c = x.shape
    out = matmul_bias_act(x.reshape(n * h * w_, c), fp["wmat"], fp["bias"], relu=True)
    outs, off = [], 0
    for co in fp["couts"]:
        outs.append(out[:, off:off + co].reshape(n, h, w_, co))
        off += co
    return outs


# -----------------------------------------------------------------------------
# Pooling (plain-JAX reduce_window)
# -----------------------------------------------------------------------------
def maxpool(x, k, stride, pad=0):
    # TODO(synk): pooling is a plain-JAX window reduction, not a Pallas kernel.
    return lax.reduce_window(
        x, -jnp.inf, lax.max,
        window_dimensions=(1, k, k, 1),
        window_strides=(1, stride, stride, 1),
        padding=((0, 0), (pad, pad), (pad, pad), (0, 0)))


def avgpool_3x3_s1_p1(x):
    # nn.AvgPool2d(3, stride=1, padding=1), count_include_pad=True (PyTorch default)
    s = lax.reduce_window(
        x, 0.0, lax.add,
        window_dimensions=(1, 3, 3, 1),
        window_strides=(1, 1, 1, 1),
        padding=((0, 0), (1, 1), (1, 1), (0, 0)))
    return s / 9.0


# -----------------------------------------------------------------------------
# Parameters (deterministic; Conv2D = conv(bias=False) + BN(eval, folded) + ReLU)
# -----------------------------------------------------------------------------
def conv_bn_params(key, cin, cout, kernel, stride=1, pad=0):
    kh, kw = (kernel, kernel) if isinstance(kernel, int) else kernel
    ph, pw = (pad, pad) if isinstance(pad, int) else pad
    w = jax.random.normal(key, (kh, kw, cin, cout), jnp.float32) * np.sqrt(2.0 / (kh * kw * cin))
    # BatchNorm2d eval-mode fold (default gamma=1, beta=0, mean=0, var=1)
    gamma = jnp.ones((cout,), jnp.float32)
    beta = jnp.zeros((cout,), jnp.float32)
    mean = jnp.zeros((cout,), jnp.float32)
    var = jnp.ones((cout,), jnp.float32)
    scale = gamma / jnp.sqrt(var + 1e-5)
    bias = beta - mean * scale
    w = w * scale                                   # fold BN scale into weights
    return dict(wmat=w.reshape(kh * kw * cin, cout), bias=bias,
                kh=kh, kw=kw, stride=stride, ph=ph, pw=pw, relu=True, cout=cout)


def block_a_params(key, cin, fpp):
    ks = jax.random.split(key, 7)
    p = dict(
        c1=conv_bn_params(ks[0], cin, 64, 1),
        pool_proj=conv_bn_params(ks[1], cin, fpp, 1),
        c3r=conv_bn_params(ks[2], cin, 64, 1),
        c3_1=conv_bn_params(ks[3], 64, 96, 3, pad=1),
        c3_2=conv_bn_params(ks[4], 96, 96, 3, pad=1),
        c5r=conv_bn_params(ks[5], cin, 48, 1),
        c5=conv_bn_params(ks[6], 48, 64, 5, pad=2),
    )
    p["fused_reduce"] = fuse_1x1([p["c1"], p["c3r"], p["c5r"]])
    return p


def block_b_params(key, cin):
    ks = jax.random.split(key, 4)
    return dict(
        b1=conv_bn_params(ks[0], cin, 384, 3, stride=2),
        b2r=conv_bn_params(ks[1], cin, 64, 1),
        b2_1=conv_bn_params(ks[2], 64, 96, 3, pad=1),
        b2_2=conv_bn_params(ks[3], 96, 96, 3, stride=2),
    )


def block_c_params(key, cin, c7):
    ks = jax.random.split(key, 10)
    p = dict(
        c1=conv_bn_params(ks[0], cin, 192, 1),
        pool_proj=conv_bn_params(ks[1], cin, 192, 1),
        b1r=conv_bn_params(ks[2], cin, c7, 1),
        b1_1=conv_bn_params(ks[3], c7, c7, (1, 7), pad=(0, 3)),
        b1_2=conv_bn_params(ks[4], c7, 192, (7, 1), pad=(3, 0)),
        b2r=conv_bn_params(ks[5], cin, c7, 1),
        b2_1=conv_bn_params(ks[6], c7, c7, (1, 7), pad=(0, 3)),
        b2_2=conv_bn_params(ks[7], c7, c7, (7, 1), pad=(3, 0)),
        b2_3=conv_bn_params(ks[8], c7, c7, (1, 7), pad=(0, 3)),
        b2_4=conv_bn_params(ks[9], c7, 192, (7, 1), pad=(3, 0)),
    )
    p["fused_reduce"] = fuse_1x1([p["c1"], p["b1r"], p["b2r"]])
    return p


def block_d_params(key, cin):
    ks = jax.random.split(key, 6)
    p = dict(
        c3r=conv_bn_params(ks[0], cin, 192, 1),
        c3=conv_bn_params(ks[1], 192, 320, 3, stride=2),
        c7r=conv_bn_params(ks[2], cin, 192, 1),
        c7_1=conv_bn_params(ks[3], 192, 192, (1, 7), pad=(0, 3)),
        c7_2=conv_bn_params(ks[4], 192, 192, (7, 1), pad=(3, 0)),
        c7_3=conv_bn_params(ks[5], 192, 192, 3, stride=2),
    )
    p["fused_reduce"] = fuse_1x1([p["c3r"], p["c7r"]])
    return p


def block_e_params(key, cin):
    ks = jax.random.split(key, 9)
    p = dict(
        c1=conv_bn_params(ks[0], cin, 320, 1),
        pool_proj=conv_bn_params(ks[1], cin, 192, 1),
        b1r=conv_bn_params(ks[2], cin, 384, 1),
        b1_1=conv_bn_params(ks[3], 384, 384, (1, 3), pad=(0, 1)),
        b1_2=conv_bn_params(ks[4], 384, 384, (3, 1), pad=(1, 0)),
        b2r=conv_bn_params(ks[5], cin, 448, 1),
        b2_1=conv_bn_params(ks[6], 448, 384, 3, pad=1),
        b2_2=conv_bn_params(ks[7], 384, 384, (1, 3), pad=(0, 1)),
        b2_3=conv_bn_params(ks[8], 384, 384, (3, 1), pad=(1, 0)),
    )
    p["fused_reduce"] = fuse_1x1([p["c1"], p["b1r"], p["b2r"]])
    return p


def init_inception_v3(key):
    keys = jax.random.split(key, 17)
    p = {}
    p["stem1"] = conv_bn_params(keys[0], 3, 32, 3, stride=2)
    p["stem2"] = conv_bn_params(keys[1], 32, 32, 3)
    p["stem3"] = conv_bn_params(keys[2], 32, 64, 3)
    p["stem4"] = conv_bn_params(keys[3], 64, 80, 1)
    p["stem5"] = conv_bn_params(keys[4], 80, 192, 3)
    p["a1"] = block_a_params(keys[5], 192, 32)
    p["a2"] = block_a_params(keys[6], 256, 64)
    p["a3"] = block_a_params(keys[7], 288, 64)
    p["b"] = block_b_params(keys[8], 288)
    p["c1"] = block_c_params(keys[9], 768, 128)
    p["c2"] = block_c_params(keys[10], 768, 160)
    p["c3"] = block_c_params(keys[11], 768, 160)
    p["c4"] = block_c_params(keys[12], 768, 192)
    p["d"] = block_d_params(keys[13], 768)
    p["e1"] = block_e_params(keys[14], 1280)
    p["e2"] = block_e_params(keys[15], 2048)
    kfc1, kfc2 = jax.random.split(keys[16])
    p["fc"] = dict(
        w=jax.random.normal(kfc1, (2048, 1000), jnp.float32) * np.sqrt(1.0 / 2048),
        b=jax.random.normal(kfc2, (1000,), jnp.float32) * 0.01,
    )
    return p


# -----------------------------------------------------------------------------
# Forward pass (matches the PyTorch InceptionV3 spec, eval mode)
# -----------------------------------------------------------------------------
def block_a_forward(x, p):
    out_1x1, out_3x3r, out_5x5r = apply_fused_1x1(x, p["fused_reduce"])
    out_pool = apply_conv(avgpool_3x3_s1_p1(x), p["pool_proj"])
    out_3x3 = apply_conv(apply_conv(out_3x3r, p["c3_1"]), p["c3_2"])
    out_5x5 = apply_conv(out_5x5r, p["c5"])
    return jnp.concatenate([out_1x1, out_3x3, out_5x5, out_pool], axis=-1)


def block_b_forward(x, p):
    out_pool = maxpool(x, 3, 2, 0)
    out_b1 = apply_conv(x, p["b1"])
    out_b2 = apply_conv(apply_conv(apply_conv(x, p["b2r"]), p["b2_1"]), p["b2_2"])
    return jnp.concatenate([out_b1, out_b2, out_pool], axis=-1)


def block_c_forward(x, p):
    out_1x1, b1r, b2r = apply_fused_1x1(x, p["fused_reduce"])
    out_pool = apply_conv(avgpool_3x3_s1_p1(x), p["pool_proj"])
    out_b1 = apply_conv(apply_conv(b1r, p["b1_1"]), p["b1_2"])
    out_b2 = apply_conv(
        apply_conv(apply_conv(apply_conv(b2r, p["b2_1"]), p["b2_2"]), p["b2_3"]),
        p["b2_4"])
    return jnp.concatenate([out_1x1, out_b1, out_b2, out_pool], axis=-1)


def block_d_forward(x, p):
    out_pool = maxpool(x, 3, 2, 0)
    c3r, c7r = apply_fused_1x1(x, p["fused_reduce"])
    out_3x3 = apply_conv(c3r, p["c3"])
    out_7x7 = apply_conv(apply_conv(apply_conv(c7r, p["c7_1"]), p["c7_2"]), p["c7_3"])
    return jnp.concatenate([out_3x3, out_7x7, out_pool], axis=-1)


def block_e_forward(x, p):
    out_1x1, b1r, b2r = apply_fused_1x1(x, p["fused_reduce"])
    out_pool = apply_conv(avgpool_3x3_s1_p1(x), p["pool_proj"])
    out_b1 = jnp.concatenate(
        [apply_conv(b1r, p["b1_1"]), apply_conv(b1r, p["b1_2"])], axis=-1)
    b2_mid = apply_conv(b2r, p["b2_1"])
    out_b2 = jnp.concatenate(
        [apply_conv(b2_mid, p["b2_2"]), apply_conv(b2_mid, p["b2_3"])], axis=-1)
    return jnp.concatenate([out_1x1, out_b1, out_b2, out_pool], axis=-1)


def inception_v3_forward(params, x_nchw):
    x = jnp.transpose(x_nchw, (0, 2, 3, 1))      # NCHW -> NHWC
    # stem
    x = apply_conv(x, params["stem1"])           # Conv2D(3, 32, 3, stride=2)
    x = apply_conv(x, params["stem2"])           # Conv2D(32, 32, 3)
    x = apply_conv(x, params["stem3"])           # Conv2D(32, 64, 3)
    x = maxpool(x, 3, 2, 0)                      # MaxPool2d(3, stride=2)
    x = apply_conv(x, params["stem4"])           # Conv2D(64, 80, 1)
    x = apply_conv(x, params["stem5"])           # Conv2D(80, 192, 3)
    x = maxpool(x, 3, 2, 0)                      # MaxPool2d(3, stride=2)
    # inception blocks
    x = block_a_forward(x, params["a1"])         # A(192, 32)  -> 256
    x = block_a_forward(x, params["a2"])         # A(256, 64)  -> 288
    x = block_a_forward(x, params["a3"])         # A(288, 64)  -> 288
    x = block_b_forward(x, params["b"])          # B(288)      -> 768
    x = block_c_forward(x, params["c1"])         # C(768, 128) -> 768
    x = block_c_forward(x, params["c2"])         # C(768, 160) -> 768
    x = block_c_forward(x, params["c3"])         # C(768, 160) -> 768
    x = block_c_forward(x, params["c4"])         # C(768, 192) -> 768
    x = block_d_forward(x, params["d"])          # D(768)      -> 1280
    x = block_e_forward(x, params["e1"])         # E(1280)     -> 2048
    x = block_e_forward(x, params["e2"])         # E(2048)     -> 2048
    # head
    x = jnp.mean(x, axis=(1, 2))                 # AdaptiveAvgPool2d(1)
    # Dropout(p=0.5): identity in eval. Flatten: no-op after 1x1 pooling.
    # Final Linear: M = batch is tiny, so native XLA GEMM beats a padded Pallas tile.
    logits = jnp.dot(x, params["fc"]["w"]) + params["fc"]["b"]
    return logits


# -----------------------------------------------------------------------------
if __name__ == "__main__":
    key = jax.random.PRNGKey(0)
    kparam, kinput = jax.random.split(key)

    params = init_inception_v3(kparam)
    # Smallest spatial size that survives the stem + the two stride-2 reduction
    # blocks (B and D) is ~79; use 80x80 with batch 2 to keep the run light.
    x = jax.random.normal(kinput, (2, 3, 80, 80), jnp.float32)

    out = inception_v3_forward(params, x)
    out = jax.block_until_ready(out)

    assert out.shape == (2, 1000), out.shape
    assert bool(jnp.all(jnp.isfinite(out)))
    print("KERNEL_OK")
</pallas_src>

<mosaic_0001>
module attributes {stable_mosaic.version = 11 : i64} {
  func.func @_matmul_bias_act_kernel(%arg0: i32, %arg1: memref<256x27xf32, #tpu.memory_space<vmem>>, %arg2: memref<27x32xf32, #tpu.memory_space<vmem>>, %arg3: memref<1x32xf32, #tpu.memory_space<vmem>>, %arg4: memref<256x32xf32, #tpu.memory_space<vmem>>) attributes {dimension_semantics = [#tpu.dimension_semantics<parallel>], iteration_bounds = array<i64: 12>, scalar_prefetch = 0 : i64, scratch_operands = 0 : i64, tpu.core_type = #tpu.core_type<tc>, window_params = [{transform_indices = @transform_0, window_bounds = array<i64: 256, 27>}, {pipeline_mode = #tpu.pipeline_mode<synchronous>, transform_indices = @transform_1, window_bounds = array<i64: 27, 32>}, {pipeline_mode = #tpu.pipeline_mode<synchronous>, transform_indices = @transform_2, window_bounds = array<i64: 1, 32>}, {transform_indices = @transform_3, window_bounds = array<i64: 256, 32>}]} {
    %c0 = arith.constant 0 : index
    %c0_0 = arith.constant 0 : index
    %0 = vector.load %arg1[%c0, %c0_0] : memref<256x27xf32, #tpu.memory_space<vmem>>, vector<256x27xf32>
    %c0_1 = arith.constant 0 : index
    %c0_2 = arith.constant 0 : index
    %1 = vector.load %arg2[%c0_1, %c0_2] : memref<27x32xf32, #tpu.memory_space<vmem>>, vector<27x32xf32>
    %cst = arith.constant dense<0.000000e+00> : vector<256x32xf32>
    %2 = tpu.matmul %0, %1, %cst {dimension_numbers = #tpu.dot_dimension_numbers<[1], [0], [0], [1], [0, 0, 1, 1], [], []>} : vector<256x27xf32>, vector<27x32xf32>, vector<256x32xf32> -> vector<256x32xf32>
    %c0_3 = arith.constant 0 : index
    %c0_4 = arith.constant 0 : index
    %3 = vector.load %arg3[%c0_3, %c0_4] : memref<1x32xf32, #tpu.memory_space<vmem>>, vector<1x32xf32>
    %4 = vector.broadcast %3 : vector<1x32xf32> to vector<256x32xf32>
    %5 = arith.addf %2, %4 : vector<256x32xf32>
    %cst_5 = arith.constant 0.000000e+00 : f32
    %6 = vector.broadcast %cst_5 : f32 to vector<256x32xf32>
    %7 = arith.maximumf %5, %6 : vector<256x32xf32>
    %c0_6 = arith.constant 0 : index
    %c0_7 = arith.constant 0 : index
    %8 = vector.load %arg4[%c0_6, %c0_7] : memref<256x32xf32, #tpu.memory_space<vmem>>, vector<256x32xf32>
    tpu.vector_store %arg4[%c0_6, %c0_7], %7 {strides = array<i32>} : memref<256x32xf32, #tpu.memory_space<vmem>>, vector<256x32xf32>,
    return
  }
  func.func @transform_0(%arg0: i32) -> (i32, i32) {
    %c0_i32 = arith.constant 0 : i32
    %c0_i32_0 = arith.constant 0 : i32
    return %arg0, %c0_i32 : i32, i32
  }
  func.func @transform_1(%arg0: i32) -> (i32, i32) {
    %c0_i32 = arith.constant 0 : i32
    %c0_i32_0 = arith.constant 0 : i32
    %c0_i32_1 = arith.constant 0 : i32
    return %c0_i32, %c0_i32_0 : i32, i32
  }
  func.func @transform_2(%arg0: i32) -> (i32, i32) {
    %c0_i32 = arith.constant 0 : i32
    %c0_i32_0 = arith.constant 0 : i32
    %c0_i32_1 = arith.constant 0 : i32
    return %c0_i32, %c0_i32_0 : i32, i32
  }
  func.func @transform_3(%arg0: i32) -> (i32, i32) {
    %c0_i32 = arith.constant 0 : i32
    %c0_i32_0 = arith.constant 0 : i32
    return %arg0, %c0_i32 : i32, i32
  }
}

</mosaic_0001>

<llo_original>
// kernel: tpu_custom_call.1
$region0: #{tpu_custom_call.1}
  #allocation0 [shape = 'u32[]', space=smem, size = 0x4, offset = 0x4, fixed_abs, tag = 'smem constant byte address 0x4 - core index']
  #allocation1 [shape = 'u32[144,128]{1,0:T(1,128)}', space=vmem, size = 0x12000, scoped, tag = 'internal scratch']
  %s0 = inlined_call_operand.vmem [shape: f32[3042,27], index: 0, kind: input, shape index: {}]
  %s1 = inlined_call_operand.vmem [shape: f32[27,32], index: 1, kind: input, shape index: {}]
  %s2 = inlined_call_operand.vmem [shape: f32[1,32], index: 2, kind: input, shape index: {}]
  %s3 = inlined_call_operand.vmem [shape: f32[3042,32], index: 3, kind: output, shape index: {}]
  %s4 = sld [smem:[#allocation0]]
  $region93: #{tpu_custom_call.1} parent=0
    _
  %s6 = ssub.s32 1, %s4
  %s7 = scalar_select 0, %s6, %s4
  $region1: #{tpu_custom_call.1} parent=0
    #allocation2 [shape = 'u8[262144]{0}', space=vmem, size = 0x40000, scoped, tag = 'output window, operand 0']
    loop: start=0, step=1, limit=14
    $region2: #{tpu_custom_call.1} parent=1 // loop_pre_header
      _
    $region3: #{tpu_custom_call.1} parent=1 // loop_header
      %s9 = sphi 0, %s13
      %p10 = scmp.ge.s32.totalorder %s9, 14
      %s19 = sphi 0, %s21
      %s22 = sphi 0, %s19
      %s23 = sphi 0, %s22
      %s39 = sphi 0, %s23
      %s43 = sphi 0, %s43
      %s45 = sphi 0, %s43
      %s46 = sphi 0, %s45
      %s60 = sphi 0, %s46
      %s64 = sphi 0, %s64
      %s66 = sphi 0, %s64
      %s67 = sphi 0, %s66
      %s81 = sphi 0, %s67
      %s87 = sphi 0, %s89
      %s90 = sphi 0, %s87
      %s91 = sphi 0, %s90
      %s107 = sphi 0, %s91
    $region4: #{tpu_custom_call.1} parent=1 // loop_header_branch
      %12 = sbr.rel (%p10) target = $region8
    $region5: #{tpu_custom_call.1} parent=1 // loop_body
      %s14 = ssub.s32 %s9, 1
      %s15 = ssub.s32 %s9, 2
      %s16 = sadd.s32 %s9, 1
      %s17 = ssub.s32 %s9, %s16
      %p18 = scmp.eq.s32.totalorder %s17, 0
      %s20 = sadd.s32 %s19, 1
      %s21 = scalar_select %p18, %s19, %s20
      %p24 = pneg %p18
      %p25 = scmp.eq.s32.totalorder %s9, 11
      %p26 = por %p24, %p25
      %p27 = scmp.ne.s32.totalorder %s19, %s22
      %p28 = scmp.eq.s32.totalorder %s9, 0
      %p29 = por %p27, %p28
      %p30 = scmp.ne.s32.totalorder %s19, %s22
      %p31 = scmp.eq.s32.totalorder %s14, 11
      %p32 = por %p30, %p31
      %p33 = scmp.ne.s32.totalorder %s22, %s23
      %p34 = scmp.eq.s32.totalorder %s14, 0
      %p35 = por %p33, %p34
      %p36 = scmp.ne.s32.totalorder %s22, %s23
      %p37 = scmp.eq.s32.totalorder %s15, 11
      %p38 = por %p36, %p37
      %p40 = scmp.ne.s32.totalorder %s23, %s39
      %p41 = scmp.eq.s32.totalorder %s15, 0
      %p42 = por %p40, %p41
      %s44 = sadd.s32 %s43, 1
      %p47 = scmp.eq.s32.totalorder %s9, 11
      %p48 = scmp.ne.s32.totalorder %s43, %s45
      %p49 = scmp.eq.s32.totalorder %s9, 0
      %p50 = por %p48, %p49
      %p51 = scmp.ne.s32.totalorder %s43, %s45
      %p52 = scmp.eq.s32.totalorder %s14, 11
      %p53 = por %p51, %p52
      %p54 = scmp.ne.s32.totalorder %s45, %s46
      %p55 = scmp.eq.s32.totalorder %s14, 0
      %p56 = por %p54, %p55
      %p57 = scmp.ne.s32.totalorder %s45, %s46
      %p58 = scmp.eq.s32.totalorder %s15, 11
      %p59 = por %p57, %p58
      %p61 = scmp.ne.s32.totalorder %s46, %s60
      %p62 = scmp.eq.s32.totalorder %s15, 0
      %p63 = por %p61, %p62
      %s65 = sadd.s32 %s64, 1
      %p68 = scmp.eq.s32.totalorder %s9, 11
      %p69 = scmp.ne.s32.totalorder %s64, %s66
      %p70 = scmp.eq.s32.totalorder %s9, 0
      %p71 = por %p69, %p70
      %p72 = scmp.ne.s32.totalorder %s64, %s66
      %p73 = scmp.eq.s32.totalorder %s14, 11
      %p74 = por %p72, %p73
      %p75 = scmp.ne.s32.totalorder %s66, %s67
      %p76 = scmp.eq.s32.totalorder %s14, 0
      %p77 = por %p75, %p76
      %p78 = scmp.ne.s32.totalorder %s66, %s67
      %p79 = scmp.eq.s32.totalorder %s15, 11
      %p80 = por %p78, %p79
      %p82 = scmp.ne.s32.totalorder %s67, %s81
      %p83 = scmp.eq.s32.totalorder %s15, 0
      %p84 = por %p82, %p83
      %s85 = ssub.s32 %s9, %s16
      %p86 = scmp.eq.s32.totalorder %s85, 0
      %s88 = sadd.s32 %s87, 1
      %s89 = scalar_select %p86, %s87, %s88
      %p92 = pneg %p86
      %p93 = scmp.eq.s32.totalorder %s9, 11
      %p94 = por %p92, %p93
      %p95 = scmp.ne.s32.totalorder %s87, %s90
      %p96 = scmp.eq.s32.totalorder %s9, 0
      %p97 = por %p95, %p96
      %p98 = scmp.ne.s32.totalorder %s87, %s90
      %p99 = scmp.eq.s32.totalorder %s14, 11
      %p100 = por %p98, %p99
      %p101 = scmp.ne.s32.totalorder %s90, %s91
      %p102 = scmp.eq.s32.totalorder %s14, 0
      %p103 = por %p101, %p102
      %p104 = scmp.ne.s32.totalorder %s90, %s91
      %p105 = scmp.eq.s32.totalorder %s15, 11
      %p106 = por %p104, %p105
      %p108 = scmp.ne.s32.totalorder %s91, %s107
      %p109 = scmp.eq.s32.totalorder %s15, 0
      %p110 = por %p108, %p109
      %p111 = scmp.le.s32.totalorder 1, %s9
      %p112 = scmp.lt.s32.totalorder %s9, 13
      %p113 = pnand %p111, %p112
      %p114 = pneg %p113
      // Predicated region
      $region9: #{tpu_custom_call.1} parent=5 // pred_check
        _
      $region10: #{tpu_custom_call.1} parent=5 // pred_check_branch
        %116 = sbr.rel (%p113) target = $region12
      $region11: #{tpu_custom_call.1} parent=5 // pred_region
        %s117 = ssub.s32 %s9, 1
        // Predicated region
        $region13: #{tpu_custom_call.1} parent=11 // pred_check
          %p118 = pneg %p56
        $region14: #{tpu_custom_call.1} parent=11 // pred_check_branch
          %120 = sbr.rel (%p118) target = $region16
        $region15: #{tpu_custom_call.1} parent=11 // pred_region
          _
        $region16: #{tpu_custom_call.1} parent=11 // pred_fallthru
          _
        // Predicated region
        $region17: #{tpu_custom_call.1} parent=11 // pred_check
          %p121 = pneg %p77
        $region18: #{tpu_custom_call.1} parent=11 // pred_check_branch
          %123 = sbr.rel (%p121) target = $region20
        $region19: #{tpu_custom_call.1} parent=11 // pred_region
          _
        $region20: #{tpu_custom_call.1} parent=11 // pred_fallthru
          _
      $region12: #{tpu_custom_call.1} parent=5 // pred_fallthru
        _
      %p124 = scmp.lt.s32.totalorder %s9, 12
      // Predicated region
      $region21: #{tpu_custom_call.1} parent=5 // pred_check
        %p125 = pneg %p124
      $region22: #{tpu_custom_call.1} parent=5 // pred_check_branch
        %127 = sbr.rel (%p125) target = $region24
      $region23: #{tpu_custom_call.1} parent=5 // pred_region
        // Predicated region
        $region25: #{tpu_custom_call.1} parent=23 // pred_check
          %p128 = pneg %p29
        $region26: #{tpu_custom_call.1} parent=23 // pred_check_branch
          %130 = sbr.rel (%p128) target = $region28
        $region27: #{tpu_custom_call.1} parent=23 // pred_region
          %s131 = smul.u32 32, %s9
          %s132 = ssub.s32 381, %s131
          %p133 = scmp.lt.s32.totalorder %s132, 32
          %s134 = scalar_select %p133, %s132, 32
          %s135 = smul.u32 128, %s134
          %p136 = scmp.lt.s32.totalorder %s131, 380
          %s137 = scalar_select %p136, %s131, 380
          %s138 = smul.addr %s137, 8
          %s139 = scalar_lea.vmem %s0, %s138
          %s140 = smul.u32 32, %s9
          %s141 = ssub.s32 381, %s140
          %p142 = scmp.lt.s32.totalorder %s141, 32
          %s143 = scalar_select %p142, %s141, 32
          %s144 = smul.u32 128, %s143
        $region28: #{tpu_custom_call.1} parent=23 // pred_fallthru
          _
      $region24: #{tpu_custom_call.1} parent=5 // pred_fallthru
        _
      %p145 = scmp.le.s32.totalorder 1, %s9
      %p146 = scmp.lt.s32.totalorder %s9, 13
      %p147 = pnand %p145, %p146
      %p148 = pneg %p147
      // Predicated region
      $region29: #{tpu_custom_call.1} parent=5 // pred_check
        _
      $region30: #{tpu_custom_call.1} parent=5 // pred_check_branch
        %150 = sbr.rel (%p147) target = $region32
      $region31: #{tpu_custom_call.1} parent=5 // pred_region
        %s151 = ssub.s32 %s9, 1
        %s152 = smul.u32 32, %s14
        %s153 = ssub.s32 381, %s152
        %p154 = scmp.lt.s32.totalorder %s153, 32
        %s155 = scalar_select %p154, %s153, 32
        %s156 = smul.u32 128, %s155
        %p157 = scmp.lt.s32.totalorder %s152, 380
        %s158 = scalar_select %p157, %s152, 380
        %s159 = smul.addr %s158, 8
        %s160 = scalar_lea.vmem %s0, %s159
        %p161 = pneg %p35
        %p162 = pneg %p32
        %p163 = pneg %p56
        %p164 = pneg %p53
        %p165 = pneg %p77
        %p166 = pneg %p74
        %p167 = pneg %p103
        %p168 = pneg %p100
        %s169 = sand.u32 %s90, 1
        %s170 = sand.u32 %s90, 1
        %s171 = smul.addr %s170, 256
        %s172 = scalar_lea.vmem [#allocation2], %s171
        %s173 = smul.u32 32, %s14
        %s174 = ssub.s32 381, %s173
        %p175 = scmp.lt.s32.totalorder %s174, 32
        %s176 = scalar_select %p175, %s174, 32
        %s177 = smul.u32 128, %s176
        %p178 = scmp.lt.s32.totalorder %s173, 380
        %s179 = scalar_select %p178, %s173, 380
        %s180 = smul.addr %s179, 8
        %s181 = scalar_lea.vmem %s0, %s180
        %s182 = smul.u32 32, %s14
        %s183 = ssub.s32 381, %s182
        %p184 = scmp.lt.s32.totalorder %s183, 32
        %s185 = scalar_select %p184, %s183, 32
        %s186 = smul.u32 128, %s185
        %s187 = smul.u32 32, %s14
        %s188 = ssub.s32 381, %s187
        %p189 = scmp.lt.s32.totalorder %s188, 32
        %s190 = scalar_select %p189, %s188, 32
        %s191 = smul.u32 128, %s190
        %v192 = vld [vmem:[%s181] sm:$0xff]
        %v193 = vld [vmem:[%s181 + $0x8] sm:$0xff]
        %v194 = vld [vmem:[%s181 + $0x10] sm:$0xff]
        %v195 = vld [vmem:[%s181 + $0x18] sm:$0xff]
        %v196 = vld [vmem:[%s181 + $0x20] sm:$0xff]
        %v197 = vld [vmem:[%s181 + $0x28] sm:$0xff]
        %v198 = vld [vmem:[%s181 + $0x30] sm:$0xff]
        %v199 = vld [vmem:[%s181 + $0x38] sm:$0xff]
        %v200 = vld [vmem:[%s181 + $0x40] sm:$0xff]
        %v201 = vld [vmem:[%s181 + $0x48] sm:$0xff]
        %v202 = vld [vmem:[%s181 + $0x50] sm:$0xff]
        %v203 = vld [vmem:[%s181 + $0x58] sm:$0xff]
        %v204 = vld [vmem:[%s181 + $0x60] sm:$0xff]
        %v205 = vld [vmem:[%s181 + $0x68] sm:$0xff]
        %v206 = vld [vmem:[%s181 + $0x70] sm:$0xff]
        %v207 = vld [vmem:[%s181 + $0x78] sm:$0xff]
        %v208 = vld [vmem:[%s181 + $0x80] sm:$0xff]
        %v209 = vld [vmem:[%s181 + $0x88] sm:$0xff]
        %v210 = vld [vmem:[%s181 + $0x90] sm:$0xff]
        %v211 = vld [vmem:[%s181 + $0x98] sm:$0xff]
        %v212 = vld [vmem:[%s181 + $0xa0] sm:$0xff]
        %v213 = vld [vmem:[%s181 + $0xa8] sm:$0xff]
        %v214 = vld [vmem:[%s181 + $0xb0] sm:$0xff]
        %v215 = vld [vmem:[%s181 + $0xb8] sm:$0xff]
        %v216 = vld [vmem:[%s181 + $0xc0] sm:$0xff]
        %v217 = vld [vmem:[%s181 + $0xc8] sm:$0xff]
        %v218 = vld [vmem:[%s181 + $0xd0] sm:$0xff]
        %v219 = vld [vmem:[%s181 + $0xd8] sm:$0xff]
        %v220 = vld [vmem:[%s181 + $0xe0] sm:$0xff]
        %v221 = vld [vmem:[%s181 + $0xe8] sm:$0xff]
        %v222 = vld [vmem:[%s181 + $0xf0] sm:$0xff]
        %v223 = vld [vmem:[%s181 + $0xf8] sm:$0xff]
        %v224 = vld [vmem:[%s1] sm:$0xff]
        %v225 = vld [vmem:[%s1 + $0x8] sm:$0xff]
        %v226 = vld [vmem:[%s1 + $0x10] sm:$0xff]
        %v227 = vld [vmem:[%s1 + $0x18] sm:$0x7]
        %v228 = vld [vmem:[%s2] sm:$0x1]
        %v230 = vlaneseq
        %v231 = vshrl.u32 %v230, 7
        %v232 = vsub.s32 0, %v231
        %v233 = vrot.slane %v228, %v232
        %vm235 = vcmask 220160
        %v237 = vsel %vm235, %v192, 0
        %v240 = vsel %vm235, %v193, 0
        %v243 = vsel %vm235, %v194, 0
        %v246 = vsel %vm235, %v195, 0
        %v249 = vsel %vm235, %v196, 0
        %v252 = vsel %vm235, %v197, 0
        %v255 = vsel %vm235, %v198, 0
        %v258 = vsel %vm235, %v199, 0
        %v261 = vsel %vm235, %v200, 0
        %v264 = vsel %vm235, %v201, 0
        %v267 = vsel %vm235, %v202, 0
        %v270 = vsel %vm235, %v203, 0
        %v273 = vsel %vm235, %v204, 0
        %v276 = vsel %vm235, %v205, 0
        %v279 = vsel %vm235, %v206, 0
        %v282 = vsel %vm235, %v207, 0
        %v285 = vsel %vm235, %v208, 0
        %v288 = vsel %vm235, %v209, 0
        %v291 = vsel %vm235, %v210, 0
        %v294 = vsel %vm235, %v211, 0
        %v297 = vsel %vm235, %v212, 0
        %v300 = vsel %vm235, %v213, 0
        %v303 = vsel %vm235, %v214, 0
        %v306 = vsel %vm235, %v215, 0
        %v309 = vsel %vm235, %v216, 0
        %v312 = vsel %vm235, %v217, 0
        %v315 = vsel %vm235, %v218, 0
        %v318 = vsel %vm235, %v219, 0
        %v321 = vsel %vm235, %v220, 0
        %v324 = vsel %vm235, %v221, 0
        %v327 = vsel %vm235, %v222, 0
        %v330 = vsel %vm235, %v223, 0
        %vm332 = vcmask 1042432
        %v334 = vsel %vm332, %v227, 0
        %336 = vmatprep.subr.mxu0 0.0
        %337 = vmatpush1.msra.mxu0 %v224
        %338 = vmatprep.subr.mxu0 0.0
        %339 = vmatpush1.msra.mxu0 %v225
        %340 = vmatprep.subr.mxu0 0.0
        %341 = vmatpush1.msra.mxu0 %v226
        %342 = vmatprep.subr.mxu0 0.0
        %343 = vmatpush1.msra.mxu0 %v334
        %344 = vmatprep.subr.mxu0 0.0
        %345 = vmatpush1.msra.mxu0 0.0
        %346 = vmatprep.subr.mxu0 0.0
        %347 = vmatpush1.msra.mxu0 0.0
        %348 = vmatprep.subr.mxu0 0.0
        %349 = vmatpush1.msra.mxu0 0.0
        %350 = vmatprep.subr.mxu0 0.0
        %351 = vmatpush1.msra.mxu0 0.0
        %352 = vmatprep.subr.mxu0 0.0
        %353 = vmatpush1.msra.mxu0 0.0
        %354 = vmatprep.subr.mxu0 0.0
        %355 = vmatpush1.msra.mxu0 0.0
        %356 = vmatprep.subr.mxu0 0.0
        %357 = vmatpush1.msra.mxu0 0.0
        %358 = vmatprep.subr.mxu0 0.0
        %359 = vmatpush1.msra.mxu0 0.0
        %360 = vmatprep.subr.mxu0 0.0
        %361 = vmatpush1.msra.mxu0 0.0
        %362 = vmatprep.subr.mxu0 0.0
        %363 = vmatpush1.msra.mxu0 0.0
        %364 = vmatprep.subr.mxu0 0.0
        %365 = vmatpush1.msra.mxu0 0.0
        %366 = vmatprep.subr.mxu0 0.0
        %367 = vmatpush1.msra.mxu0 0.0
        %368 = vmatprep.subr.mxu0 0.0
        %369 = vmatpush1.msra.mxu0 0.0
        %370 = vmatprep.subr.mxu0 0.0
        %371 = vmatpush1.msra.mxu0 0.0
        %372 = vmatprep.subr.mxu0 0.0
        %373 = vmatpush1.msra.mxu0 0.0
        %374 = vmatprep.subr.mxu0 0.0
        %375 = vmatpush1.msra.mxu0 0.0
        %376 = vmatprep.subr.mxu0 0.0
        %377 = vmatpush1.msra.mxu0 0.0
        %378 = vmatprep.subr.mxu0 0.0
        %379 = vmatpush1.msra.mxu0 0.0
        %380 = vmatprep.subr.mxu0 0.0
        %381 = vmatpush1.msra.mxu0 0.0
        %382 = vmatprep.subr.mxu0 0.0
        %383 = vmatpush1.msra.mxu0 0.0
        %384 = vmatprep.subr.mxu0 0.0
        %385 = vmatpush1.msra.mxu0 0.0
        %386 = vmatprep.subr.mxu0 0.0
        %387 = vmatpush1.msra.mxu0 0.0
        %388 = vmatprep.subr.mxu0 0.0
        %389 = vmatpush1.msra.mxu0 0.0
        %390 = vmatprep.subr.mxu0 0.0
        %391 = vmatpush1.msra.mxu0 0.0
        %392 = vmatprep.subr.mxu0 0.0
        %393 = vmatpush1.msra.mxu0 0.0
        %394 = vmatprep.subr.mxu0 0.0
        %395 = vmatpush1.msra.mxu0 0.0
        %396 = vmatprep.subr.mxu0 0.0
        %397 = vmatpush1.msra.mxu0 0.0
        %398 = vmatprep.subr.mxu0 0.0
        %399 = vmatpush1.msra.mxu0 0.0
        %400 = vmatprep.mubr.f32.mxu0 0.0
        %401 = vmatmul.mubr.f32.gmra.mrb[0].mxu0 %v237
        %v402 = vpop.f32.mrb[0].mxu0
        %v403 = vadd.f32 %v233, %v402
        %v404 = vpop.f32.mrb[0].mxu0
        %405 = vmatprep.mubr.f32.mxu0 0.0
        %406 = vmatmul.mubr.f32.gmra.mrb[0].mxu0 %v240
        %v407 = vpop.f32.mrb[0].mxu0
        %v408 = vadd.f32 %v233, %v407
        %v409 = vpop.f32.mrb[0].mxu0
        %410 = vmatprep.mubr.f32.mxu0 0.0
        %411 = vmatmul.mubr.f32.gmra.mrb[0].mxu0 %v243
        %v412 = vpop.f32.mrb[0].mxu0
        %v413 = vadd.f32 %v233, %v412
        %v414 = vpop.f32.mrb[0].mxu0
        %415 = vmatprep.mubr.f32.mxu0 0.0
        %416 = vmatmul.mubr.f32.gmra.mrb[0].mxu0 %v246
        %v417 = vpop.f32.mrb[0].mxu0
        %v418 = vadd.f32 %v233, %v417
        %v419 = vpop.f32.mrb[0].mxu0
        %420 = vmatprep.mubr.f32.mxu0 0.0
        %421 = vmatmul.mubr.f32.gmra.mrb[0].mxu0 %v249
        %v422 = vpop.f32.mrb[0].mxu0
        %v423 = vadd.f32 %v233, %v422
        %v424 = vpop.f32.mrb[0].mxu0
        %425 = vmatprep.mubr.f32.mxu0 0.0
        %426 = vmatmul.mubr.f32.gmra.mrb[0].mxu0 %v252
        %v427 = vpop.f32.mrb[0].mxu0
        %v428 = vadd.f32 %v233, %v427
        %v429 = vpop.f32.mrb[0].mxu0
        %430 = vmatprep.mubr.f32.mxu0 0.0
        %431 = vmatmul.mubr.f32.gmra.mrb[0].mxu0 %v255
        %v432 = vpop.f32.mrb[0].mxu0
        %v433 = vadd.f32 %v233, %v432
        %v434 = vpop.f32.mrb[0].mxu0
        %435 = vmatprep.mubr.f32.mxu0 0.0
        %436 = vmatmul.mubr.f32.gmra.mrb[0].mxu0 %v258
        %v437 = vpop.f32.mrb[0].mxu0
        %v438 = vadd.f32 %v233, %v437
        %v439 = vpop.f32.mrb[0].mxu0
        %440 = vmatprep.mubr.f32.mxu0 0.0
        %441 = vmatmul.mubr.f32.gmra.mrb[0].mxu0 %v261
        %v442 = vpop.f32.mrb[0].mxu0
        %v443 = vadd.f32 %v233, %v442
        %v444 = vpop.f32.mrb[0].mxu0
        %445 = vmatprep.mubr.f32.mxu0 0.0
        %446 = vmatmul.mubr.f32.gmra.mrb[0].mxu0 %v264
        %v447 = vpop.f32.mrb[0].mxu0
        %v448 = vadd.f32 %v233, %v447
        %v449 = vpop.f32.mrb[0].mxu0
        %450 = vmatprep.mubr.f32.mxu0 0.0
        %451 = vmatmul.mubr.f32.gmra.mrb[0].mxu0 %v267
        %v452 = vpop.f32.mrb[0].mxu0
        %v453 = vadd.f32 %v233, %v452
        %v454 = vpop.f32.mrb[0].mxu0
        %455 = vmatprep.mubr.f32.mxu0 0.0
        %456 = vmatmul.mubr.f32.gmra.mrb[0].mxu0 %v270
        %v457 = vpop.f32.mrb[0].mxu0
        %v458 = vadd.f32 %v233, %v457
        %v459 = vpop.f32.mrb[0].mxu0
        %460 = vmatprep.mubr.f32.mxu0 0.0
        %461 = vmatmul.mubr.f32.gmra.mrb[0].mxu0 %v273
        %v462 = vpop.f32.mrb[0].mxu0
        %v463 = vadd.f32 %v233, %v462
        %v464 = vpop.f32.mrb[0].mxu0
        %465 = vmatprep.mubr.f32.mxu0 0.0
        %466 = vmatmul.mubr.f32.gmra.mrb[0].mxu0 %v276
        %v467 = vpop.f32.mrb[0].mxu0
        %v468 = vadd.f32 %v233, %v467
        %v469 = vpop.f32.mrb[0].mxu0
        %470 = vmatprep.mubr.f32.mxu0 0.0
        %471 = vmatmul.mubr.f32.gmra.mrb[0].mxu0 %v279
        %v472 = vpop.f32.mrb[0].mxu0
        %v473 = vadd.f32 %v233, %v472
        %v474 = vpop.f32.mrb[0].mxu0
        %475 = vmatprep.mubr.f32.mxu0 0.0
        %476 = vmatmul.mubr.f32.gmra.mrb[0].mxu0 %v282
        %v477 = vpop.f32.mrb[0].mxu0
        %v478 = vadd.f32 %v233, %v477
        %v479 = vpop.f32.mrb[0].mxu0
        %480 = vmatprep.mubr.f32.mxu0 0.0
        %481 = vmatmul.mubr.f32.gmra.mrb[0].mxu0 %v285
        %v482 = vpop.f32.mrb[0].mxu0
        %v483 = vadd.f32 %v233, %v482
        %v484 = vpop.f32.mrb[0].mxu0
        %485 = vmatprep.mubr.f32.mxu0 0.0
        %486 = vmatmul.mubr.f32.gmra.mrb[0].mxu0 %v288
        %v487 = vpop.f32.mrb[0].mxu0
        %v488 = vadd.f32 %v233, %v487
        %v489 = vpop.f32.mrb[0].mxu0
        %490 = vmatprep.mubr.f32.mxu0 0.0
        %491 = vmatmul.mubr.f32.gmra.mrb[0].mxu0 %v291
        %v492 = vpop.f32.mrb[0].mxu0
        %v493 = vadd.f32 %v233, %v492
        %v494 = vpop.f32.mrb[0].mxu0
        %495 = vmatprep.mubr.f32.mxu0 0.0
        %496 = vmatmul.mubr.f32.gmra.mrb[0].mxu0 %v294
        %v497 = vpop.f32.mrb[0].mxu0
        %v498 = vadd.f32 %v233, %v497
        %v499 = vpop.f32.mrb[0].mxu0
        %500 = vmatprep.mubr.f32.mxu0 0.0
        %501 = vmatmul.mubr.f32.gmra.mrb[0].mxu0 %v297
        %v502 = vpop.f32.mrb[0].mxu0
        %v503 = vadd.f32 %v233, %v502
        %v504 = vpop.f32.mrb[0].mxu0
        %505 = vmatprep.mubr.f32.mxu0 0.0
        %506 = vmatmul.mubr.f32.gmra.mrb[0].mxu0 %v300
        %v507 = vpop.f32.mrb[0].mxu0
        %v508 = vadd.f32 %v233, %v507
        %v509 = vpop.f32.mrb[0].mxu0
        %510 = vmatprep.mubr.f32.mxu0 0.0
        %511 = vmatmul.mubr.f32.gmra.mrb[0].mxu0 %v303
        %v512 = vpop.f32.mrb[0].mxu0
        %v513 = vadd.f32 %v233, %v512
        %v514 = vpop.f32.mrb[0].mxu0
        %515 = vmatprep.mubr.f32.mxu0 0.0
        %516 = vmatmul.mubr.f32.gmra.mrb[0].mxu0 %v306
        %v517 = vpop.f32.mrb[0].mxu0
        %v518 = vadd.f32 %v233, %v517
        %v519 = vpop.f32.mrb[0].mxu0
        %520 = vmatprep.mubr.f32.mxu0 0.0
        %521 = vmatmul.mubr.f32.gmra.mrb[0].mxu0 %v309
        %v522 = vpop.f32.mrb[0].mxu0
        %v523 = vadd.f32 %v233, %v522
        %v524 = vpop.f32.mrb[0].mxu0
        %525 = vmatprep.mubr.f32.mxu0 0.0
        %526 = vmatmul.mubr.f32.gmra.mrb[0].mxu0 %v312
        %v527 = vpop.f32.mrb[0].mxu0
        %v528 = vadd.f32 %v233, %v527
        %v529 = vpop.f32.mrb[0].mxu0
        %530 = vmatprep.mubr.f32.mxu0 0.0
        %531 = vmatmul.mubr.f32.gmra.mrb[0].mxu0 %v315
        %v532 = vpop.f32.mrb[0].mxu0
        %v533 = vadd.f32 %v233, %v532
        %v534 = vpop.f32.mrb[0].mxu0
        %535 = vmatprep.mubr.f32.mxu0 0.0
        %536 = vmatmul.mubr.f32.gmra.mrb[0].mxu0 %v318
        %v537 = vpop.f32.mrb[0].mxu0
        %v538 = vadd.f32 %v233, %v537
        %v539 = vpop.f32.mrb[0].mxu0
        %540 = vmatprep.mubr.f32.mxu0 0.0
        %541 = vmatmul.mubr.f32.gmra.mrb[0].mxu0 %v321
        %v542 = vpop.f32.mrb[0].mxu0
        %v543 = vadd.f32 %v233, %v542
        %v544 = vpop.f32.mrb[0].mxu0
        %545 = vmatprep.mubr.f32.mxu0 0.0
        %546 = vmatmul.mubr.f32.gmra.mrb[0].mxu0 %v324
        %v547 = vpop.f32.mrb[0].mxu0
        %v548 = vadd.f32 %v233, %v547
        %v549 = vpop.f32.mrb[0].mxu0
        %550 = vmatprep.mubr.f32.mxu0 0.0
        %551 = vmatmul.mubr.f32.gmra.mrb[0].mxu0 %v327
        %v552 = vpop.f32.mrb[0].mxu0
        %v553 = vadd.f32 %v233, %v552
        %v554 = vpop.f32.mrb[0].mxu0
        %555 = vmatprep.mubr.f32.mxu0 0.0
        %556 = vmatmul.mubr.f32.gmra.mrb[0].mxu0 %v330
        %v557 = vpop.f32.mrb[0].mxu0
        %v558 = vadd.f32 %v233, %v557
        %v559 = vpop.f32.mrb[0].mxu0
        %560 = vdwg.mxu0
        %v561 = vmax.f32 %v403, 0.0
        %v562 = vmax.f32 %v408, 0.0
        %v563 = vmax.f32 %v413, 0.0
        %v564 = vmax.f32 %v418, 0.0
        %v565 = vmax.f32 %v423, 0.0
        %v566 = vmax.f32 %v428, 0.0
        %v567 = vmax.f32 %v433, 0.0
        %v568 = vmax.f32 %v438, 0.0
        %v569 = vmax.f32 %v443, 0.0
        %v570 = vmax.f32 %v448, 0.0
        %v571 = vmax.f32 %v453, 0.0
        %v572 = vmax.f32 %v458, 0.0
        %v573 = vmax.f32 %v463, 0.0
        %v574 = vmax.f32 %v468, 0.0
        %v575 = vmax.f32 %v473, 0.0
        %v576 = vmax.f32 %v478, 0.0
        %v577 = vmax.f32 %v483, 0.0
        %v578 = vmax.f32 %v488, 0.0
        %v579 = vmax.f32 %v493, 0.0
        %v580 = vmax.f32 %v498, 0.0
        %v581 = vmax.f32 %v503, 0.0
        %v582 = vmax.f32 %v508, 0.0
        %v583 = vmax.f32 %v513, 0.0
        %v584 = vmax.f32 %v518, 0.0
        %v585 = vmax.f32 %v523, 0.0
        %v586 = vmax.f32 %v528, 0.0
        %v587 = vmax.f32 %v533, 0.0
        %v588 = vmax.f32 %v538, 0.0
        %v589 = vmax.f32 %v543, 0.0
        %v590 = vmax.f32 %v548, 0.0
        %v591 = vmax.f32 %v553, 0.0
        %v592 = vmax.f32 %v558, 0.0
        %vm593 = vcmask 261120
        %594 = vst.msk [vmem:[%s172] sm:$0xff] %vm593, %v561
        %595 = vst.msk [vmem:[%s172 + $0x8] sm:$0xff] %vm593, %v562
        %596 = vst.msk [vmem:[%s172 + $0x10] sm:$0xff] %vm593, %v563
        %597 = vst.msk [vmem:[%s172 + $0x18] sm:$0xff] %vm593, %v564
        %598 = vst.msk [vmem:[%s172 + $0x20] sm:$0xff] %vm593, %v565
        %599 = vst.msk [vmem:[%s172 + $0x28] sm:$0xff] %vm593, %v566
        %600 = vst.msk [vmem:[%s172 + $0x30] sm:$0xff] %vm593, %v567
        %601 = vst.msk [vmem:[%s172 + $0x38] sm:$0xff] %vm593, %v568
        %602 = vst.msk [vmem:[%s172 + $0x40] sm:$0xff] %vm593, %v569
        %603 = vst.msk [vmem:[%s172 + $0x48] sm:$0xff] %vm593, %v570
        %604 = vst.msk [vmem:[%s172 + $0x50] sm:$0xff] %vm593, %v571
        %605 = vst.msk [vmem:[%s172 + $0x58] sm:$0xff] %vm593, %v572
        %606 = vst.msk [vmem:[%s172 + $0x60] sm:$0xff] %vm593, %v573
        %607 = vst.msk [vmem:[%s172 + $0x68] sm:$0xff] %vm593, %v574
        %608 = vst.msk [vmem:[%s172 + $0x70] sm:$0xff] %vm593, %v575
        %609 = vst.msk [vmem:[%s172 + $0x78] sm:$0xff] %vm593, %v576
        %610 = vst.msk [vmem:[%s172 + $0x80] sm:$0xff] %vm593, %v577
        %611 = vst.msk [vmem:[%s172 + $0x88] sm:$0xff] %vm593, %v578
        %612 = vst.msk [vmem:[%s172 + $0x90] sm:$0xff] %vm593, %v579
        %613 = vst.msk [vmem:[%s172 + $0x98] sm:$0xff] %vm593, %v580
        %614 = vst.msk [vmem:[%s172 + $0xa0] sm:$0xff] %vm593, %v581
        %615 = vst.msk [vmem:[%s172 + $0xa8] sm:$0xff] %vm593, %v582
        %616 = vst.msk [vmem:[%s172 + $0xb0] sm:$0xff] %vm593, %v583
        %617 = vst.msk [vmem:[%s172 + $0xb8] sm:$0xff] %vm593, %v584
        %618 = vst.msk [vmem:[%s172 + $0xc0] sm:$0xff] %vm593, %v585
        %619 = vst.msk [vmem:[%s172 + $0xc8] sm:$0xff] %vm593, %v586
        %620 = vst.msk [vmem:[%s172 + $0xd0] sm:$0xff] %vm593, %v587
        %621 = vst.msk [vmem:[%s172 + $0xd8] sm:$0xff] %vm593, %v588
        %622 = vst.msk [vmem:[%s172 + $0xe0] sm:$0xff] %vm593, %v589
        %623 = vst.msk [vmem:[%s172 + $0xe8] sm:$0xff] %vm593, %v590
        %624 = vst.msk [vmem:[%s172 + $0xf0] sm:$0xff] %vm593, %v591
        %625 = vst.msk [vmem:[%s172 + $0xf8] sm:$0xff] %vm593, %v592
        %s626 = sand.u32 %s90, 1
        %s627 = sand.u32 %s90, 1
        %s628 = smul.addr %s627, 256
        %s629 = scalar_lea.vmem [#allocation2], %s628
        // Predicated region
        $region33: #{tpu_custom_call.1} parent=31 // pred_check
          %p630 = pneg %p100
        $region34: #{tpu_custom_call.1} parent=31 // pred_check_branch
          %632 = sbr.rel (%p630) target = $region36
        $region35: #{tpu_custom_call.1} parent=31 // pred_region
          %s633 = smul.u32 32, %s14
          %s634 = ssub.s32 381, %s633
          %p635 = scmp.lt.s32.totalorder %s634, 32
          %s636 = scalar_select %p635, %s634, 32
          %s637 = smul.u32 128, %s636
          %p638 = scmp.ne.s32.totalorder 0, %s637
          %s639 = smul.addr %s633, 8
          %s640 = scalar_lea.vmem %s3, %s639
          // Predicated region
          $region37: #{tpu_custom_call.1} parent=35 // pred_check
            %p641 = pneg %p638
          $region38: #{tpu_custom_call.1} parent=35 // pred_check_branch
            %643 = sbr.rel (%p641) target = $region40
          $region39: #{tpu_custom_call.1} parent=35 // pred_region
            // Predicated region
            $region41: #{tpu_custom_call.1} parent=39 // pred_check
              _
            $region42: #{tpu_custom_call.1} parent=39 // pred_check_branch
              %645 = sbr.rel (0) target = $region44
            $region43: #{tpu_custom_call.1} parent=39 // pred_region
              // Predicated region
              $region63: #{tpu_custom_call.1} parent=43 // pred_check
                _
              $region64: #{tpu_custom_call.1} parent=43 // pred_check_branch
                %756 = sbr.rel (0) target = $region66
              $region65: #{tpu_custom_call.1} parent=43 // pred_region
                %s757 = sshrl.u32 %s636, 5
                // While loop
                $region67: #{tpu_custom_call.1} parent=65 // loop_pre_header
                  _
                $region68: #{tpu_custom_call.1} parent=65 // loop_header
                  %s759 = sphi 0, %s761
                  %p760 = scmp.ge.s32.totalorder %s759, %s757
                  %s764 = sphi 0, %s833
                  %s765 = sphi %s629, %s836
                  %s766 = sphi %s640, %s837
                $region69: #{tpu_custom_call.1} parent=65 // loop_header_branch
                  %763 = sbr.rel (%p760) target = $region73
                $region70: #{tpu_custom_call.1} parent=65 // loop_body
                  %v767 = vld [vmem:[%s765] sm:$0xff]
                  %768 = vst [vmem:[%s766] sm:$0xff] %v767
                  %v769 = vld [vmem:[%s765 + $0x8] sm:$0xff]
                  %770 = vst [vmem:[%s766 + $0x8] sm:$0xff] %v769
                  %v771 = vld [vmem:[%s765 + $0x10] sm:$0xff]
                  %772 = vst [vmem:[%s766 + $0x10] sm:$0xff] %v771
                  %v773 = vld [vmem:[%s765 + $0x18] sm:$0xff]
                  %774 = vst [vmem:[%s766 + $0x18] sm:$0xff] %v773
                  %v775 = vld [vmem:[%s765 + $0x20] sm:$0xff]
                  %776 = vst [vmem:[%s766 + $0x20] sm:$0xff] %v775
                  %v777 = vld [vmem:[%s765 + $0x28] sm:$0xff]
                  %778 = vst [vmem:[%s766 + $0x28] sm:$0xff] %v777
                  %v779 = vld [vmem:[%s765 + $0x30] sm:$0xff]
                  %780 = vst [vmem:[%s766 + $0x30] sm:$0xff] %v779
                  %v781 = vld [vmem:[%s765 + $0x38] sm:$0xff]
                  %782 = vst [vmem:[%s766 + $0x38] sm:$0xff] %v781
                  %v783 = vld [vmem:[%s765 + $0x40] sm:$0xff]
                  %784 = vst [vmem:[%s766 + $0x40] sm:$0xff] %v783
                  %v785 = vld [vmem:[%s765 + $0x48] sm:$0xff]
                  %786 = vst [vmem:[%s766 + $0x48] sm:$0xff] %v785
                  %v787 = vld [vmem:[%s765 + $0x50] sm:$0xff]
                  %788 = vst [vmem:[%s766 + $0x50] sm:$0xff] %v787
                  %v789 = vld [vmem:[%s765 + $0x58] sm:$0xff]
                  %790 = vst [vmem:[%s766 + $0x58] sm:$0xff] %v789
                  %v791 = vld [vmem:[%s765 + $0x60] sm:$0xff]
                  %792 = vst [vmem:[%s766 + $0x60] sm:$0xff] %v791
                  %v793 = vld [vmem:[%s765 + $0x68] sm:$0xff]
                  %794 = vst [vmem:[%s766 + $0x68] sm:$0xff] %v793
                  %v795 = vld [vmem:[%s765 + $0x70] sm:$0xff]
                  %796 = vst [vmem:[%s766 + $0x70] sm:$0xff] %v795
                  %v797 = vld [vmem:[%s765 + $0x78] sm:$0xff]
                  %798 = vst [vmem:[%s766 + $0x78] sm:$0xff] %v797
                  %v799 = vld [vmem:[%s765 + $0x80] sm:$0xff]
                  %800 = vst [vmem:[%s766 + $0x80] sm:$0xff] %v799
                  %v801 = vld [vmem:[%s765 + $0x88] sm:$0xff]
                  %802 = vst [vmem:[%s766 + $0x88] sm:$0xff] %v801
                  %v803 = vld [vmem:[%s765 + $0x90] sm:$0xff]
                  %804 = vst [vmem:[%s766 + $0x90] sm:$0xff] %v803
                  %v805 = vld [vmem:[%s765 + $0x98] sm:$0xff]
                  %806 = vst [vmem:[%s766 + $0x98] sm:$0xff] %v805
                  %v807 = vld [vmem:[%s765 + $0xa0] sm:$0xff]
                  %808 = vst [vmem:[%s766 + $0xa0] sm:$0xff] %v807
                  %v809 = vld [vmem:[%s765 + $0xa8] sm:$0xff]
                  %810 = vst [vmem:[%s766 + $0xa8] sm:$0xff] %v809
                  %v811 = vld [vmem:[%s765 + $0xb0] sm:$0xff]
                  %812 = vst [vmem:[%s766 + $0xb0] sm:$0xff] %v811
                  %v813 = vld [vmem:[%s765 + $0xb8] sm:$0xff]
                  %814 = vst [vmem:[%s766 + $0xb8] sm:$0xff] %v813
                  %v815 = vld [vmem:[%s765 + $0xc0] sm:$0xff]
                  %816 = vst [vmem:[%s766 + $0xc0] sm:$0xff] %v815
                  %v817 = vld [vmem:[%s765 + $0xc8] sm:$0xff]
                  %818 = vst [vmem:[%s766 + $0xc8] sm:$0xff] %v817
                  %v819 = vld [vmem:[%s765 + $0xd0] sm:$0xff]
                  %820 = vst [vmem:[%s766 + $0xd0] sm:$0xff] %v819
                  %v821 = vld [vmem:[%s765 + $0xd8] sm:$0xff]
                  %822 = vst [vmem:[%s766 + $0xd8] sm:$0xff] %v821
                  %v823 = vld [vmem:[%s765 + $0xe0] sm:$0xff]
                  %824 = vst [vmem:[%s766 + $0xe0] sm:$0xff] %v823
                  %v825 = vld [vmem:[%s765 + $0xe8] sm:$0xff]
                  %826 = vst [vmem:[%s766 + $0xe8] sm:$0xff] %v825
                  %v827 = vld [vmem:[%s765 + $0xf0] sm:$0xff]
                  %828 = vst [vmem:[%s766 + $0xf0] sm:$0xff] %v827
                  %v829 = vld [vmem:[%s765 + $0xf8] sm:$0xff]
                  %830 = vst [vmem:[%s766 + $0xf8] sm:$0xff] %v829
                  %s831 = sadd.s32 1, %s764
                  %p832 = scmp.ge.s32.totalorder %s831, %s757
                  %s833 = scalar_select %p832, 0, %s831
                  %s834 = smul.u32 %s833, 256
                  %s835 = smul.u32 %s833, 256
                  %s836 = scalar_lea.vmem %s629, %s834 [#allocation2]
                  %s837 = scalar_lea.vmem %s640, %s835
                $region71: #{tpu_custom_call.1} parent=65 // loop_footer
                  %s761 = sadd.s32 %s759, 1
                $region72: #{tpu_custom_call.1} parent=65 // loop_footer_branch
                  %758 = sbr.rel target = $region68
                $region73: #{tpu_custom_call.1} parent=65 // loop_exit
                  _
                %s838 = sshrl.u32 %s636, 5
                %s839 = sand.u32 %s636, 31
                %s840 = smul.u32 %s838, 32
                %s841 = smul.u32 8, %s840
                %s842 = scalar_lea.vmem %s629, %s841 [#allocation2]
                %s843 = smul.u32 8, %s840
                %s844 = scalar_lea.vmem %s640, %s843
                // While loop
                $region74: #{tpu_custom_call.1} parent=65 // loop_pre_header
                  _
                $region75: #{tpu_custom_call.1} parent=65 // loop_header
                  %s846 = sphi 0, %s848
                  %p847 = scmp.ge.s32.totalorder %s846, %s839
                  %s851 = sphi 0, %s858
                  %s852 = sphi %s842, %s861
                  %s853 = sphi %s844, %s862
                $region76: #{tpu_custom_call.1} parent=65 // loop_header_branch
                  %850 = sbr.rel (%p847) target = $region80
                $region77: #{tpu_custom_call.1} parent=65 // loop_body
                  %v854 = vld [vmem:[%s852] sm:$0xff]
                  %855 = vst [vmem:[%s853] sm:$0xff] %v854
                  %s856 = sadd.s32 1, %s851
                  %p857 = scmp.ge.s32.totalorder %s856, %s839
                  %s858 = scalar_select %p857, 0, %s856
                  %s859 = smul.u32 %s858, 8
                  %s860 = smul.u32 %s858, 8
                  %s861 = scalar_lea.vmem %s842, %s859 [#allocation2]
                  %s862 = scalar_lea.vmem %s844, %s860
                $region78: #{tpu_custom_call.1} parent=65 // loop_footer
                  %s848 = sadd.s32 %s846, 1
                $region79: #{tpu_custom_call.1} parent=65 // loop_footer_branch
                  %845 = sbr.rel target = $region75
                $region80: #{tpu_custom_call.1} parent=65 // loop_exit
                  _
              $region66: #{tpu_custom_call.1} parent=43 // pred_fallthru
                _
              // Predicated region
              $region81: #{tpu_custom_call.1} parent=43 // pred_check
                _
              $region82: #{tpu_custom_call.1} parent=43 // pred_check_branch
                %864 = sbr.rel target = $region84
              $region83: #{tpu_custom_call.1} parent=43 // pred_region
                _
              $region84: #{tpu_custom_call.1} parent=43 // pred_fallthru
                _
            $region44: #{tpu_custom_call.1} parent=39 // pred_fallthru
              _
            // Predicated region
            $region45: #{tpu_custom_call.1} parent=39 // pred_check
              _
            $region46: #{tpu_custom_call.1} parent=39 // pred_check_branch
              %647 = sbr.rel target = $region48
            $region47: #{tpu_custom_call.1} parent=39 // pred_region
              %s649 = sshrl.u32 %s636, 5
              // While loop
              $region49: #{tpu_custom_call.1} parent=47 // loop_pre_header
                _
              $region50: #{tpu_custom_call.1} parent=47 // loop_header
                %s651 = sphi 0, %s653
                %p652 = scmp.ge.s32.totalorder %s651, %s649
                %s656 = sphi 0, %s725
                %s657 = sphi %s629, %s728
                %s658 = sphi %s640, %s729
              $region51: #{tpu_custom_call.1} parent=47 // loop_header_branch
                %655 = sbr.rel (%p652) target = $region55
              $region52: #{tpu_custom_call.1} parent=47 // loop_body
                %v659 = vld [vmem:[%s657] sm:$0xff]
                %660 = vst [vmem:[%s658] sm:$0xff] %v659
                %v661 = vld [vmem:[%s657 + $0x8] sm:$0xff]
                %662 = vst [vmem:[%s658 + $0x8] sm:$0xff] %v661
                %v663 = vld [vmem:[%s657 + $0x10] sm:$0xff]
                %664 = vst [vmem:[%s658 + $0x10] sm:$0xff] %v663
                %v665 = vld [vmem:[%s657 + $0x18] sm:$0xff]
                %666 = vst [vmem:[%s658 + $0x18] sm:$0xff] %v665
                %v667 = vld [vmem:[%s657 + $0x20] sm:$0xff]
                %668 = vst [vmem:[%s658 + $0x20] sm:$0xff] %v667
                %v669 = vld [vmem:[%s657 + $0x28] sm:$0xff]
                %670 = vst [vmem:[%s658 + $0x28] sm:$0xff] %v669
                %v671 = vld [vmem:[%s657 + $0x30] sm:$0xff]
                %672 = vst [vmem:[%s658 + $0x30] sm:$0xff] %v671
                %v673 = vld [vmem:[%s657 + $0x38] sm:$0xff]
                %674 = vst [vmem:[%s658 + $0x38] sm:$0xff] %v673
                %v675 = vld [vmem:[%s657 + $0x40] sm:$0xff]
                %676 = vst [vmem:[%s658 + $0x40] sm:$0xff] %v675
                %v677 = vld [vmem:[%s657 + $0x48] sm:$0xff]
                %678 = vst [vmem:[%s658 + $0x48] sm:$0xff] %v677
                %v679 = vld [vmem:[%s657 + $0x50] sm:$0xff]
                %680 = vst [vmem:[%s658 + $0x50] sm:$0xff] %v679
                %v681 = vld [vmem:[%s657 + $0x58] sm:$0xff]
                %682 = vst [vmem:[%s658 + $0x58] sm:$0xff] %v681
                %v683 = vld [vmem:[%s657 + $0x60] sm:$0xff]
                %684 = vst [vmem:[%s658 + $0x60] sm:$0xff] %v683
                %v685 = vld [vmem:[%s657 + $0x68] sm:$0xff]
                %686 = vst [vmem:[%s658 + $0x68] sm:$0xff] %v685
                %v687 = vld [vmem:[%s657 + $0x70] sm:$0xff]
                %688 = vst [vmem:[%s658 + $0x70] sm:$0xff] %v687
                %v689 = vld [vmem:[%s657 + $0x78] sm:$0xff]
                %690 = vst [vmem:[%s658 + $0x78] sm:$0xff] %v689
                %v691 = vld [vmem:[%s657 + $0x80] sm:$0xff]
                %692 = vst [vmem:[%s658 + $0x80] sm:$0xff] %v691
                %v693 = vld [vmem:[%s657 + $0x88] sm:$0xff]
                %694 = vst [vmem:[%s658 + $0x88] sm:$0xff] %v693
                %v695 = vld [vmem:[%s657 + $0x90] sm:$0xff]
                %696 = vst [vmem:[%s658 + $0x90] sm:$0xff] %v695
                %v697 = vld [vmem:[%s657 + $0x98] sm:$0xff]
                %698 = vst [vmem:[%s658 + $0x98] sm:$0xff] %v697
                %v699 = vld [vmem:[%s657 + $0xa0] sm:$0xff]
                %700 = vst [vmem:[%s658 + $0xa0] sm:$0xff] %v699
                %v701 = vld [vmem:[%s657 + $0xa8] sm:$0xff]
                %702 = vst [vmem:[%s658 + $0xa8] sm:$0xff] %v701
                %v703 = vld [vmem:[%s657 + $0xb0] sm:$0xff]
                %704 = vst [vmem:[%s658 + $0xb0] sm:$0xff] %v703
                %v705 = vld [vmem:[%s657 + $0xb8] sm:$0xff]
                %706 = vst [vmem:[%s658 + $0xb8] sm:$0xff] %v705
                %v707 = vld [vmem:[%s657 + $0xc0] sm:$0xff]
                %708 = vst [vmem:[%s658 + $0xc0] sm:$0xff] %v707
                %v709 = vld [vmem:[%s657 + $0xc8] sm:$0xff]
                %710 = vst [vmem:[%s658 + $0xc8] sm:$0xff] %v709
                %v711 = vld [vmem:[%s657 + $0xd0] sm:$0xff]
                %712 = vst [vmem:[%s658 + $0xd0] sm:$0xff] %v711
                %v713 = vld [vmem:[%s657 + $0xd8] sm:$0xff]
                %714 = vst [vmem:[%s658 + $0xd8] sm:$0xff] %v713
                %v715 = vld [vmem:[%s657 + $0xe0] sm:$0xff]
                %716 = vst [vmem:[%s658 + $0xe0] sm:$0xff] %v715
                %v717 = vld [vmem:[%s657 + $0xe8] sm:$0xff]
                %718 = vst [vmem:[%s658 + $0xe8] sm:$0xff] %v717
                %v719 = vld [vmem:[%s657 + $0xf0] sm:$0xff]
                %720 = vst [vmem:[%s658 + $0xf0] sm:$0xff] %v719
                %v721 = vld [vmem:[%s657 + $0xf8] sm:$0xff]
                %722 = vst [vmem:[%s658 + $0xf8] sm:$0xff] %v721
                %s723 = sadd.s32 1, %s656
                %p724 = scmp.ge.s32.totalorder %s723, %s649
                %s725 = scalar_select %p724, 0, %s723
                %s726 = smul.u32 %s725, 256
                %s727 = smul.u32 %s725, 256
                %s728 = scalar_lea.vmem %s629, %s726 [#allocation2]
                %s729 = scalar_lea.vmem %s640, %s727
              $region53: #{tpu_custom_call.1} parent=47 // loop_footer
                %s653 = sadd.s32 %s651, 1
              $region54: #{tpu_custom_call.1} parent=47 // loop_footer_branch
                %650 = sbr.rel target = $region50
              $region55: #{tpu_custom_call.1} parent=47 // loop_exit
                _
              %s730 = sshrl.u32 %s636, 5
              %s731 = sand.u32 %s636, 31
              %s732 = smul.u32 %s730, 32
              %s733 = smul.u32 8, %s732
              %s734 = scalar_lea.vmem %s629, %s733 [#allocation2]
              %s735 = smul.u32 8, %s732
              %s736 = scalar_lea.vmem %s640, %s735
              // While loop
              $region56: #{tpu_custom_call.1} parent=47 // loop_pre_header
                _
              $region57: #{tpu_custom_call.1} parent=47 // loop_header
                %s738 = sphi 0, %s740
                %p739 = scmp.ge.s32.totalorder %s738, %s731
                %s743 = sphi 0, %s750
                %s744 = sphi %s734, %s753
                %s745 = sphi %s736, %s754
              $region58: #{tpu_custom_call.1} parent=47 // loop_header_branch
                %742 = sbr.rel (%p739) target = $region62
              $region59: #{tpu_custom_call.1} parent=47 // loop_body
                %v746 = vld [vmem:[%s744] sm:$0xff]
                %747 = vst [vmem:[%s745] sm:$0xff] %v746
                %s748 = sadd.s32 1, %s743
                %p749 = scmp.ge.s32.totalorder %s748, %s731
                %s750 = scalar_select %p749, 0, %s748
                %s751 = smul.u32 %s750, 8
                %s752 = smul.u32 %s750, 8
                %s753 = scalar_lea.vmem %s734, %s751 [#allocation2]
                %s754 = scalar_lea.vmem %s736, %s752
              $region60: #{tpu_custom_call.1} parent=47 // loop_footer
                %s740 = sadd.s32 %s738, 1
              $region61: #{tpu_custom_call.1} parent=47 // loop_footer_branch
                %737 = sbr.rel target = $region57
              $region62: #{tpu_custom_call.1} parent=47 // loop_exit
                _
            $region48: #{tpu_custom_call.1} parent=39 // pred_fallthru
              _
          $region40: #{tpu_custom_call.1} parent=35 // pred_fallthru
            _
          %865 = vnop
        $region36: #{tpu_custom_call.1} parent=31 // pred_fallthru
          _
      $region32: #{tpu_custom_call.1} parent=5 // pred_fallthru
        _
      %p866 = scmp.le.s32.totalorder 2, %s9
      // Predicated region
      $region85: #{tpu_custom_call.1} parent=5 // pred_check
        %p867 = pneg %p866
      $region86: #{tpu_custom_call.1} parent=5 // pred_check_branch
        %869 = sbr.rel (%p867) target = $region88
      $region87: #{tpu_custom_call.1} parent=5 // pred_region
        %s870 = ssub.s32 %s9, 2
        // Predicated region
        $region89: #{tpu_custom_call.1} parent=87 // pred_check
          %p871 = pneg %p106
        $region90: #{tpu_custom_call.1} parent=87 // pred_check_branch
          %873 = sbr.rel (%p871) target = $region92
        $region91: #{tpu_custom_call.1} parent=87 // pred_region
          %s874 = sand.u32 %s91, 1
          %s875 = sand.u32 %s91, 1
          %s876 = smul.addr %s875, 256
          %s877 = scalar_lea.vmem [#allocation2], %s876
        $region92: #{tpu_custom_call.1} parent=87 // pred_fallthru
          _
      $region88: #{tpu_custom_call.1} parent=5 // pred_fallthru
        _
    $region6: #{tpu_custom_call.1} parent=1 // loop_footer
      %s13 = sadd.s32 1, %s9
    $region7: #{tpu_custom_call.1} parent=1 // loop_footer_branch
      %8 = sbr.rel target = $region3
    $region8: #{tpu_custom_call.1} parent=1 // loop_exit
      _

</llo_original>
